<compile_context>
chip_gen: v5e
topology: v5e:2x2
jax: 0.10.0
libtpu: 0.0.40
codegen_flags: <defaults>
</compile_context>

<pallas_src>
import jax
import jax.numpy as jnp
from jax.experimental import pallas as pl
from jax.experimental.pallas import tpu as pltpu


IN_SIZE = 64
H_SIZE = 16
OUT_SIZE = 16


def mlp_kernel(x_ref, w1_ref, b1_ref, w2_ref, b2_ref, o_ref):
    # First linear: (tb, in) @ (in, h) with f32 accumulation on the MXU.
    h = jnp.dot(x_ref[...], w1_ref[...], preferred_element_type=jnp.float32)
    h = h + b1_ref[...].astype(jnp.float32)
    # ReLU on the VPU, cast back to bf16 (matches torch bf16 activations).
    h = jnp.maximum(h, 0.0).astype(jnp.bfloat16)
    # Second linear: (tb, h) @ (h, out).
    y = jnp.dot(h, w2_ref[...], preferred_element_type=jnp.float32)
    y = y + b2_ref[...].astype(jnp.float32)
    o_ref[...] = y.astype(o_ref.dtype)


def nn_forward(x, w1, b1, w2, b2, *, tb=1024):
    """x: (B, IN_SIZE) bf16 -> (B, OUT_SIZE) bf16."""
    B = x.shape[0]

    # Normalize the batch tile: multiple of 16 (bf16 sublane packing), at
    # least 16, and no larger than the (rounded-up) batch so tiny batches
    # don't allocate a huge tile.
    tb = max(16, (int(tb) // 16) * 16)
    tb = min(tb, pl.cdiv(B, 16) * 16)

    # Pad ragged batches with zeros so the grid is exact; slice afterwards.
    B_pad = pl.cdiv(B, tb) * tb
    if B_pad != B:
        x = jnp.pad(x, ((0, B_pad - B), (0, 0)))

    # Biases as (1, N) so they are 2-D refs in VMEM.
    b1_2d = b1.reshape(1, H_SIZE)
    b2_2d = b2.reshape(1, OUT_SIZE)

    grid = (B_pad // tb,)

    # Double-buffered per-step footprint (bf16): x tile + out tile, plus the
    # (tiny, <3 KiB) weights/biases.  Give generous headroom but stay safely
    # under v7x's 64 MiB physical VMEM.
    per_step_bytes = 2 * tb * (IN_SIZE + OUT_SIZE) * 2
    vmem_limit = int(min(48 << 20, max(32 << 20, 8 * per_step_bytes)))

    # Advisory cost estimate: purely HBM-bandwidth bound (~16 FLOP/byte).
    flops = 2 * B_pad * (IN_SIZE * H_SIZE + H_SIZE * OUT_SIZE)
    bytes_accessed = (
        B_pad * IN_SIZE * 2            # read x
        + B_pad * OUT_SIZE * 2         # write y
        + (IN_SIZE * H_SIZE + H_SIZE + H_SIZE * OUT_SIZE + OUT_SIZE) * 2
    )
    cost = pl.CostEstimate(flops=flops, transcendentals=0,
                           bytes_accessed=bytes_accessed)

    out = pl.pallas_call(
        mlp_kernel,
        out_shape=jax.ShapeDtypeStruct((B_pad, OUT_SIZE), jnp.bfloat16),
        grid_spec=pltpu.PrefetchScalarGridSpec(
            num_scalar_prefetch=0,
            grid=grid,
            in_specs=[
                pl.BlockSpec((tb, IN_SIZE), lambda i: (i, 0)),       # x tile
                pl.BlockSpec((IN_SIZE, H_SIZE), lambda i: (0, 0)),   # W1 (full)
                pl.BlockSpec((1, H_SIZE), lambda i: (0, 0)),         # b1
                pl.BlockSpec((H_SIZE, OUT_SIZE), lambda i: (0, 0)),  # W2 (full)
                pl.BlockSpec((1, OUT_SIZE), lambda i: (0, 0)),       # b2
            ],
            out_specs=pl.BlockSpec((tb, OUT_SIZE), lambda i: (i, 0)),
        ),
        compiler_params=pltpu.CompilerParams(
            dimension_semantics=("parallel",),   # batch tiles independent ->
            vmem_limit_bytes=vmem_limit,         # megacore sharding on v7x
        ),
        cost_estimate=cost,
    )(x, w1, b1_2d, w2, b2_2d)

    return out[:B] if B_pad != B else out


def init_params(key):
    """Deterministic synthetic init matching the shapes of NN.__init__."""
    k1, k2, k3, k4 = jax.random.split(key, 4)
    # PyTorch Linear weight is (out, in); we store transposed (in, out).
    bound1 = 1.0 / (IN_SIZE ** 0.5)
    bound2 = 1.0 / (H_SIZE ** 0.5)
    w1 = jax.random.uniform(k1, (IN_SIZE, H_SIZE), jnp.float32, -bound1, bound1)
    b1 = jax.random.uniform(k2, (H_SIZE,), jnp.float32, -bound1, bound1)
    w2 = jax.random.uniform(k3, (H_SIZE, OUT_SIZE), jnp.float32, -bound2, bound2)
    b2 = jax.random.uniform(k4, (OUT_SIZE,), jnp.float32, -bound2, bound2)
    # Module is cast to bfloat16 in __init__ (self.to(dtype=torch.bfloat16)).
    return (w1.astype(jnp.bfloat16), b1.astype(jnp.bfloat16),
            w2.astype(jnp.bfloat16), b2.astype(jnp.bfloat16))


def _ref_forward(x, w1, b1, w2, b2):
    """Plain-JAX reference with the same numerics (f32 accumulate, bf16 cast)."""
    h = (jnp.dot(x, w1, preferred_element_type=jnp.float32)
         + b1.astype(jnp.float32))
    h = jnp.maximum(h, 0.0).astype(jnp.bfloat16)
    y = (jnp.dot(h, w2, preferred_element_type=jnp.float32)
         + b2.astype(jnp.float32))
    return y.astype(jnp.bfloat16)


if __name__ == "__main__":
    key = jax.random.PRNGKey(0)
    kx, kp = jax.random.split(key)
    w1, b1, w2, b2 = init_params(kp)

    # Case 1: small ragged batch (exercises the padding / tile-clamp path).
    B1 = 8
    x1 = jax.random.normal(kx, (B1, IN_SIZE), jnp.float32).astype(jnp.bfloat16)
    out1 = jax.block_until_ready(nn_forward(x1, w1, b1, w2, b2))
    ref1 = _ref_forward(x1, w1, b1, w2, b2)
    assert out1.shape == (B1, OUT_SIZE) and out1.dtype == jnp.bfloat16
    assert jnp.allclose(out1.astype(jnp.float32), ref1.astype(jnp.float32),
                        atol=2e-2, rtol=2e-2)

    # Case 2: ragged batch with a multi-step pipelined grid (tb < B).
    B2 = 200
    x2 = jax.random.normal(jax.random.PRNGKey(1), (B2, IN_SIZE),
                           jnp.float32).astype(jnp.bfloat16)
    out2 = jax.block_until_ready(nn_forward(x2, w1, b1, w2, b2, tb=64))
    ref2 = _ref_forward(x2, w1, b1, w2, b2)
    assert out2.shape == (B2, OUT_SIZE) and out2.dtype == jnp.bfloat16
    assert jnp.allclose(out2.astype(jnp.float32), ref2.astype(jnp.float32),
                        atol=2e-2, rtol=2e-2)

    print("KERNEL_OK")
</pallas_src>

<mosaic_0001>
module attributes {stable_mosaic.version = 11 : i64} {
  func.func @mlp_kernel(%arg0: i32, %arg1: memref<16x64xbf16, #tpu.memory_space<vmem>>, %arg2: memref<64x16xbf16, #tpu.memory_space<vmem>>, %arg3: memref<1x16xbf16, #tpu.memory_space<vmem>>, %arg4: memref<16x16xbf16, #tpu.memory_space<vmem>>, %arg5: memref<1x16xbf16, #tpu.memory_space<vmem>>, %arg6: memref<16x16xbf16, #tpu.memory_space<vmem>>) attributes {dimension_semantics = [#tpu.dimension_semantics<parallel>], iteration_bounds = array<i64: 1>, scalar_prefetch = 0 : i64, scratch_operands = 0 : i64, tpu.core_type = #tpu.core_type<tc>, window_params = [{transform_indices = @transform_0, window_bounds = array<i64: 16, 64>}, {pipeline_mode = #tpu.pipeline_mode<synchronous>, transform_indices = @transform_1, window_bounds = array<i64: 64, 16>}, {pipeline_mode = #tpu.pipeline_mode<synchronous>, transform_indices = @transform_2, window_bounds = array<i64: 1, 16>}, {pipeline_mode = #tpu.pipeline_mode<synchronous>, transform_indices = @transform_3, window_bounds = array<i64: 16, 16>}, {pipeline_mode = #tpu.pipeline_mode<synchronous>, transform_indices = @transform_4, window_bounds = array<i64: 1, 16>}, {transform_indices = @transform_5, window_bounds = array<i64: 16, 16>}]} {
    %c0 = arith.constant 0 : index
    %c0_0 = arith.constant 0 : index
    %0 = vector.load %arg1[%c0, %c0_0] : memref<16x64xbf16, #tpu.memory_space<vmem>>, vector<16x64xbf16>
    %c0_1 = arith.constant 0 : index
    %c0_2 = arith.constant 0 : index
    %1 = vector.load %arg2[%c0_1, %c0_2] : memref<64x16xbf16, #tpu.memory_space<vmem>>, vector<64x16xbf16>
    %cst = arith.constant dense<0.000000e+00> : vector<16x16xf32>
    %2 = tpu.matmul %0, %1, %cst {dimension_numbers = #tpu.dot_dimension_numbers<[1], [0], [0], [1], [0, 0, 1, 1], [], []>} : vector<16x64xbf16>, vector<64x16xbf16>, vector<16x16xf32> -> vector<16x16xf32>
    %c0_3 = arith.constant 0 : index
    %c0_4 = arith.constant 0 : index
    %3 = vector.load %arg3[%c0_3, %c0_4] : memref<1x16xbf16, #tpu.memory_space<vmem>>, vector<1x16xbf16>
    %4 = arith.extf %3 : vector<1x16xbf16> to vector<1x16xf32>
    %5 = vector.broadcast %4 : vector<1x16xf32> to vector<16x16xf32>
    %6 = arith.addf %2, %5 : vector<16x16xf32>
    %cst_5 = arith.constant 0.000000e+00 : f32
    %7 = vector.broadcast %cst_5 : f32 to vector<16x16xf32>
    %8 = arith.maximumf %6, %7 : vector<16x16xf32>
    %9 = arith.truncf %8 : vector<16x16xf32> to vector<16x16xbf16>
    %c0_6 = arith.constant 0 : index
    %c0_7 = arith.constant 0 : index
    %10 = vector.load %arg4[%c0_6, %c0_7] : memref<16x16xbf16, #tpu.memory_space<vmem>>, vector<16x16xbf16>
    %cst_8 = arith.constant dense<0.000000e+00> : vector<16x16xf32>
    %11 = tpu.matmul %9, %10, %cst_8 {dimension_numbers = #tpu.dot_dimension_numbers<[1], [0], [0], [1], [0, 0, 1, 1], [], []>} : vector<16x16xbf16>, vector<16x16xbf16>, vector<16x16xf32> -> vector<16x16xf32>
    %c0_9 = arith.constant 0 : index
    %c0_10 = arith.constant 0 : index
    %12 = vector.load %arg5[%c0_9, %c0_10] : memref<1x16xbf16, #tpu.memory_space<vmem>>, vector<1x16xbf16>
    %13 = arith.extf %12 : vector<1x16xbf16> to vector<1x16xf32>
    %14 = vector.broadcast %13 : vector<1x16xf32> to vector<16x16xf32>
    %15 = arith.addf %11, %14 : vector<16x16xf32>
    %16 = arith.truncf %15 : vector<16x16xf32> to vector<16x16xbf16>
    %c0_11 = arith.constant 0 : index
    %c0_12 = arith.constant 0 : index
    %17 = vector.load %arg6[%c0_11, %c0_12] : memref<16x16xbf16, #tpu.memory_space<vmem>>, vector<16x16xbf16>
    tpu.vector_store %arg6[%c0_11, %c0_12], %16 {strides = array<i32>} : memref<16x16xbf16, #tpu.memory_space<vmem>>, vector<16x16xbf16>,
    return
  }
  func.func @transform_0(%arg0: i32) -> (i32, i32) {
    %c0_i32 = arith.constant 0 : i32
    %c0_i32_0 = arith.constant 0 : i32
    return %arg0, %c0_i32 : i32, i32
  }
  func.func @transform_1(%arg0: i32) -> (i32, i32) {
    %c0_i32 = arith.constant 0 : i32
    %c0_i32_0 = arith.constant 0 : i32
    %c0_i32_1 = arith.constant 0 : i32
    return %c0_i32, %c0_i32_0 : i32, i32
  }
  func.func @transform_2(%arg0: i32) -> (i32, i32) {
    %c0_i32 = arith.constant 0 : i32
    %c0_i32_0 = arith.constant 0 : i32
    %c0_i32_1 = arith.constant 0 : i32
    return %c0_i32, %c0_i32_0 : i32, i32
  }
  func.func @transform_3(%arg0: i32) -> (i32, i32) {
    %c0_i32 = arith.constant 0 : i32
    %c0_i32_0 = arith.constant 0 : i32
    %c0_i32_1 = arith.constant 0 : i32
    return %c0_i32, %c0_i32_0 : i32, i32
  }
  func.func @transform_4(%arg0: i32) -> (i32, i32) {
    %c0_i32 = arith.constant 0 : i32
    %c0_i32_0 = arith.constant 0 : i32
    %c0_i32_1 = arith.constant 0 : i32
    return %c0_i32, %c0_i32_0 : i32, i32
  }
  func.func @transform_5(%arg0: i32) -> (i32, i32) {
    %c0_i32 = arith.constant 0 : i32
    %c0_i32_0 = arith.constant 0 : i32
    return %arg0, %c0_i32 : i32, i32
  }
}

</mosaic_0001>

<llo_original>
// kernel: tpu_custom_call.1
$region0: #{tpu_custom_call.1}
  #allocation0 [shape = 'u32[]', space=smem, size = 0x4, offset = 0x4, fixed_abs, tag = 'smem constant byte address 0x4 - core index']
  #allocation1 [shape = 'u32[72,128]{1,0:T(1,128)}', space=vmem, size = 0x9000, scoped, tag = 'internal scratch']
  %s0 = inlined_call_operand.vmem [shape: bf16[16,64], index: 0, kind: input, shape index: {}]
  %s1 = inlined_call_operand.vmem [shape: bf16[64,16], index: 1, kind: input, shape index: {}]
  %s2 = inlined_call_operand.vmem [shape: bf16[1,16], index: 2, kind: input, shape index: {}]
  %s3 = inlined_call_operand.vmem [shape: bf16[16,16], index: 3, kind: input, shape index: {}]
  %s4 = inlined_call_operand.vmem [shape: bf16[1,16], index: 4, kind: input, shape index: {}]
  %s5 = inlined_call_operand.hbm [shape: bf16[16,16], index: 5, kind: output, shape index: {}]
  %s6 = sld [smem:[#allocation0]]
  $region30: #{tpu_custom_call.1} parent=0
    _
  %s8 = ssub.s32 1, %s6
  %s9 = scalar_select 0, %s8, %s6
  $region1: #{tpu_custom_call.1} parent=0
    #allocation2 [shape = 'u8[4096]{0}', space=vmem, size = 0x1000, scoped, tag = 'output window, operand 0, single buffered']
    #allocation3 [shape = 's32[1]{0}', space=sflag, size = 0x4, scoped, tag = 'scoped memory for tpu_custom_call.1']
    %10 = vsyncpa [#allocation3], 0
    // Predicated region
    $region2: #{tpu_custom_call.1} parent=1 // pred_check
      _
    $region3: #{tpu_custom_call.1} parent=1 // pred_check_branch
      %12 = sbr.rel (0) target = $region5
    $region4: #{tpu_custom_call.1} parent=1 // pred_region
      _
    $region5: #{tpu_custom_call.1} parent=1 // pred_fallthru
      _
    // Predicated region
    $region6: #{tpu_custom_call.1} parent=1 // pred_check
      _
    $region7: #{tpu_custom_call.1} parent=1 // pred_check_branch
      %14 = sbr.rel (0) target = $region9
    $region8: #{tpu_custom_call.1} parent=1 // pred_region
      _
    $region9: #{tpu_custom_call.1} parent=1 // pred_fallthru
      _
    // Predicated region
    $region10: #{tpu_custom_call.1} parent=1 // pred_check
      _
    $region11: #{tpu_custom_call.1} parent=1 // pred_check_branch
      %16 = sbr.rel (0) target = $region13
    $region12: #{tpu_custom_call.1} parent=1 // pred_region
      _
    $region13: #{tpu_custom_call.1} parent=1 // pred_fallthru
      _
    // Predicated region
    $region14: #{tpu_custom_call.1} parent=1 // pred_check
      _
    $region15: #{tpu_custom_call.1} parent=1 // pred_check_branch
      %18 = sbr.rel (0) target = $region17
    $region16: #{tpu_custom_call.1} parent=1 // pred_region
      _
    $region17: #{tpu_custom_call.1} parent=1 // pred_fallthru
      _
    // Predicated region
    $region18: #{tpu_custom_call.1} parent=1 // pred_check
      _
    $region19: #{tpu_custom_call.1} parent=1 // pred_check_branch
      %20 = sbr.rel (0) target = $region21
    $region20: #{tpu_custom_call.1} parent=1 // pred_region
      _
    $region21: #{tpu_custom_call.1} parent=1 // pred_fallthru
      _
    %v22 = vld [vmem:[%s0] sm:$0xf]
    %v23 = vld [vmem:[%s0 + $0x4] sm:$0xf]
    %v24 = vld [vmem:[%s1] sm:$0xf]
    %v25 = vld [vmem:[%s1 + $0x4] sm:$0xf]
    %v26 = vld [vmem:[%s1 + $0x8] sm:$0xf]
    %v27 = vld [vmem:[%s1 + $0xc] sm:$0xf]
    %v28 = vld [vmem:[%s1 + $0x10] sm:$0xf]
    %v29 = vld [vmem:[%s1 + $0x14] sm:$0xf]
    %v30 = vld [vmem:[%s1 + $0x18] sm:$0xf]
    %v31 = vld [vmem:[%s1 + $0x1c] sm:$0xf]
    %v32 = vld [vmem:[%s2] sm:$0x1]
    %v33 = vunpack.c.l.bf16 %v32
    %v34 = vperm.slane %v33, 0
    %v37 = vunpack.c.l.b16 %v22
    %v38 = vunpack.c.l.b16 %v23
    %v39 = vpack.c.b16 %v38, %v37
    %v48 = vunpack.c.l.b16 %v24
    %v49 = vunpack.c.l.b16 %v25
    %v50 = vunpack.c.l.b16 %v26
    %v51 = vunpack.c.l.b16 %v27
    %v52 = vunpack.c.l.b16 %v28
    %v53 = vunpack.c.l.b16 %v29
    %v54 = vunpack.c.l.b16 %v30
    %v55 = vunpack.c.l.b16 %v31
    %v56 = vpack.c.b16 %v49, %v48
    %v57 = vpack.c.b16 %v51, %v50
    %v58 = vpack.c.b16 %v53, %v52
    %v59 = vpack.c.b16 %v55, %v54
    %vm64 = vcmask 523264
    %v66 = vsel %vm64, %v39, 0
    %68 = vmatpush.bf16.msra.mxu0 0
    %69 = vmatpush.bf16.msra.mxu0 0
    %70 = vmatpush.bf16.msra.mxu0 0
    %71 = vmatpush.bf16.msra.mxu0 0
    %72 = vmatpush.bf16.msra.mxu0 %v59
    %73 = vmatpush.bf16.msra.mxu0 %v58
    %74 = vmatpush.bf16.msra.mxu0 %v57
    %75 = vmatpush.bf16.msra.mxu0 %v56
    %76 = vmatmul.bf16.gmra.mxu0 %v66
    %v77 = vpop.f32.mrf.mxu0
    %v78 = vadd.f32 %v34, %v77
    %v79 = vpop.f32.mrf.mxu0
    %v80 = vadd.f32 %v34, %v79
    %81 = vdwg.mxu0
    %v82 = vmax.f32 %v78, 0.0
    %v83 = vmax.f32 %v80, 0.0
    %v84 = vpack.c.bf16 %v83, %v82
    %v85 = vld [vmem:[%s3] sm:$0xf]
    %v86 = vld [vmem:[%s3 + $0x4] sm:$0xf]
    %v87 = vld [vmem:[%s4] sm:$0x1]
    %v88 = vunpack.c.l.bf16 %v87
    %v89 = vperm.slane %v88, 0
    %v92 = vunpack.c.l.b16 %v85
    %v93 = vunpack.c.l.b16 %v86
    %v94 = vpack.c.b16 %v93, %v92
    %vm96 = vcmask 130048
    %v98 = vsel %vm96, %v84, 0
    %100 = vmatpush.bf16.msra.mxu0 0
    %101 = vmatpush.bf16.msra.mxu0 0
    %102 = vmatpush.bf16.msra.mxu0 0
    %103 = vmatpush.bf16.msra.mxu0 0
    %104 = vmatpush.bf16.msra.mxu0 0
    %105 = vmatpush.bf16.msra.mxu0 0
    %106 = vmatpush.bf16.msra.mxu0 0
    %107 = vmatpush.bf16.msra.mxu0 %v94
    %108 = vmatmul.bf16.gmra.mxu0 %v98
    %v109 = vpop.f32.mrf.mxu0
    %v110 = vadd.f32 %v89, %v109
    %v111 = vpop.f32.mrf.mxu0
    %v112 = vadd.f32 %v89, %v111
    %113 = vdwg.mxu0
    %v114 = vpack.c.bf16 %v110, %v110
    %v115 = vpack.c.bf16 %v112, %v112
    %vm116 = vcmask 125952
    %117 = vst.msk [vmem:[#allocation2] sm:$0xf] %vm116, %v114
    %118 = vst.msk [vmem:[#allocation2 + $0x4] sm:$0xf] %vm116, %v115
    // Predicated region
    $region22: #{tpu_custom_call.1} parent=1 // pred_check
      _
    $region23: #{tpu_custom_call.1} parent=1 // pred_check_branch
      %120 = sbr.rel (0) target = $region25
    $region24: #{tpu_custom_call.1} parent=1 // pred_region
      %122 = vsyncadd [#allocation3], 0
      %s123 = sshll.u32 [#allocation2], 4
      %s124 = int_to_ptr.vmem [resolvable:$true] %s123
      %s125 = sshll.u32 %s5, 4
      %s126 = int_to_ptr.hbm [resolvable:$true] %s125
      %131 = dma.vmem_to_hbm [thread:$0]  %s124, 128, %s126, [#allocation3], 64, 64, 4
    $region25: #{tpu_custom_call.1} parent=1 // pred_fallthru
      _
    // Predicated region
    $region26: #{tpu_custom_call.1} parent=1 // pred_check
      _
    $region27: #{tpu_custom_call.1} parent=1 // pred_check_branch
      %133 = sbr.rel (0) target = $region29
    $region28: #{tpu_custom_call.1} parent=1 // pred_region
      %135 = dma.done [#allocation3], 128
    $region29: #{tpu_custom_call.1} parent=1 // pred_fallthru
      _
    %136 = vsyncpa [#allocation3], 1

</llo_original>
